<compile_context>
chip_gen: v7x
topology: tpu7x:2x2x1
jax: 0.10.0
libtpu: 0.0.40
codegen_flags: <defaults>
</compile_context>

<pallas_src>
import functools

import jax
import jax.numpy as jnp
from jax.experimental import pallas as pl
from jax.experimental.pallas import tpu as pltpu


def _round_up(x, m):
    return ((x + m - 1) // m) * m


# Tile caps.  (2*tk*tn + 2*tm*tk)*2B + tm*tn*4B stays under ~6 MiB at the caps,
# comfortably inside every generation's scoped VMEM.
_TM_CAP = 256
_TN_CAP = 512
_TK_CAP = 2048
_VMEM_LIMIT = 32 * 1024 * 1024


def _pick_tile(padded_dim, cap):
    """Largest multiple of 128 that divides `padded_dim` and is <= cap."""
    best = 128
    t = 128
    while t <= cap:
        if padded_dim % t == 0:
            best = t
        t += 128
    return best


# ----------------------------------------------------------------------------
# Pallas kernels: K-tiled matmul with f32 accumulator + fused bias / residual /
# ReLU epilogue; stores in the output dtype (bf16 for intermediate layers).
# ----------------------------------------------------------------------------
def _mm_kernel(a_ref, b_ref, bias_ref, o_ref, acc_ref, *, relu):
    k = pl.program_id(2)

    @pl.when(k == 0)
    def _():
        acc_ref[...] = jnp.zeros_like(acc_ref)

    acc_ref[...] += jnp.dot(a_ref[...], b_ref[...],
                            preferred_element_type=jnp.float32)

    @pl.when(k == pl.num_programs(2) - 1)
    def _():
        out = acc_ref[...] + bias_ref[...]
        if relu:
            out = jnp.maximum(out, 0.0)
        o_ref[...] = out.astype(o_ref.dtype)


def _mm_res_kernel(a_ref, b_ref, bias_ref, res_ref, o_ref, acc_ref, *, relu):
    k = pl.program_id(2)

    @pl.when(k == 0)
    def _():
        acc_ref[...] = jnp.zeros_like(acc_ref)

    acc_ref[...] += jnp.dot(a_ref[...], b_ref[...],
                            preferred_element_type=jnp.float32)

    @pl.when(k == pl.num_programs(2) - 1)
    def _():
        out = acc_ref[...] + bias_ref[...] + res_ref[...].astype(jnp.float32)
        if relu:
            out = jnp.maximum(out, 0.0)
        o_ref[...] = out.astype(o_ref.dtype)


@functools.partial(jax.jit, static_argnames=("relu", "out_dtype"))
def matmul_bias_act(a, w_pad, bias_pad, relu=False, out_dtype=jnp.bfloat16,
                    residual=None):
    """act(a @ w + bias [+ residual]); padded output columns are kept.

    a:        (M, K) float; cast to bf16 and zero-padded to (Mp, Kp).
    w_pad:    (Kp, Np) bf16, zero-padded, pre-transposed to (in, out).
    bias_pad: (1, Np) f32, zero-padded.
    residual: optional (M, Np) bf16, added in the epilogue before ReLU.
    Returns (M, Np) array of `out_dtype`.
    """
    M, K = a.shape
    Kp, Np = w_pad.shape

    tm = min(_TM_CAP, _round_up(max(M, 1), 16))
    Mp = _round_up(M, tm)
    tn = _pick_tile(Np, _TN_CAP)
    tk = _pick_tile(Kp, _TK_CAP)
    # v7x has 2 TensorCores: keep >= 2 parallel output tiles when it is free.
    if (Mp // tm) * (Np // tn) < 2 and tn > 128 and (tn // 2) % 128 == 0:
        tn //= 2

    a = a.astype(jnp.bfloat16)
    if Mp != M or Kp != K:
        a = jnp.pad(a, ((0, Mp - M), (0, Kp - K)))

    in_specs = [
        pl.BlockSpec((tm, tk), lambda i, j, k: (i, k)),
        pl.BlockSpec((tk, tn), lambda i, j, k: (k, j)),
        pl.BlockSpec((1, tn), lambda i, j, k: (0, j)),
    ]
    args = [a, w_pad, bias_pad]

    if residual is not None:
        r = residual.astype(jnp.bfloat16)
        if Mp != M:
            r = jnp.pad(r, ((0, Mp - M), (0, 0)))
        in_specs.append(pl.BlockSpec((tm, tn), lambda i, j, k: (i, j)))
        args.append(r)
        kernel = functools.partial(_mm_res_kernel, relu=relu)
    else:
        kernel = functools.partial(_mm_kernel, relu=relu)

    out = pl.pallas_call(
        kernel,
        out_shape=jax.ShapeDtypeStruct((Mp, Np), out_dtype),
        grid=(Mp // tm, Np // tn, Kp // tk),
        in_specs=in_specs,
        out_specs=pl.BlockSpec((tm, tn), lambda i, j, k: (i, j)),
        scratch_shapes=[pltpu.VMEM((tm, tn), jnp.float32)],
        compiler_params=pltpu.CompilerParams(
            dimension_semantics=("parallel", "parallel", "arbitrary"),
            vmem_limit_bytes=_VMEM_LIMIT),
    )(*args)
    if Mp != M:
        out = out[:M]
    return out


# ----------------------------------------------------------------------------
# Conv-as-im2col-matmul, pooling glue (all bf16, channel-padded throughout)
# ----------------------------------------------------------------------------
def _im2col(x, kh, kw, stride, pad):
    n, h, w, c = x.shape
    xp = jnp.pad(x, ((0, 0), (pad, pad), (pad, pad), (0, 0)))
    ho = (h + 2 * pad - kh) // stride + 1
    wo = (w + 2 * pad - kw) // stride + 1
    cols = []
    for i in range(kh):
        for j in range(kw):
            cols.append(xp[:, i:i + stride * ho:stride, j:j + stride * wo:stride, :])
    patches = jnp.concatenate(cols, axis=-1)     # bf16, (n, ho, wo, kh*kw*c)
    return patches.reshape(n * ho * wo, kh * kw * c), ho, wo


@functools.partial(jax.jit,
                   static_argnames=("kh", "kw", "stride", "pad", "relu"))
def conv2d_bias_act(x, w_pad, bias_pad, kh, kw, stride, pad, relu,
                    residual=None):
    """x: NHWC bf16 (channels kept padded); returns NHWC bf16 padded output."""
    n = x.shape[0]
    if kh == 1 and kw == 1 and pad == 0:
        # 1x1 conv: im2col is just a (strided) view + reshape.
        if stride != 1:
            x = x[:, ::stride, ::stride, :]
        ho, wo = x.shape[1], x.shape[2]
        patches = x.reshape(n * ho * wo, x.shape[3])
    else:
        patches, ho, wo = _im2col(x, kh, kw, stride, pad)
    res2d = None
    if residual is not None:
        res2d = residual.reshape(n * ho * wo, residual.shape[3])
    out = matmul_bias_act(patches, w_pad, bias_pad, relu=relu,
                          out_dtype=jnp.bfloat16, residual=res2d)
    return out.reshape(n, ho, wo, w_pad.shape[1])


def maxpool_3x3_s2_p1(x):
    return jax.lax.reduce_window(
        x, jnp.array(-jnp.inf, x.dtype), jax.lax.max,
        window_dimensions=(1, 3, 3, 1),
        window_strides=(1, 2, 2, 1),
        padding=((0, 0), (1, 1), (1, 1), (0, 0)))


# ----------------------------------------------------------------------------
# Parameter construction (deterministic; BN folded; weights pre-transposed,
# per-tap channel-padded and pre-cast to bf16 once here).
# ----------------------------------------------------------------------------
_BN_EPS = 1e-5


def _fold_bn(w, gamma, beta, mean, var):
    scale = gamma / jnp.sqrt(var + _BN_EPS)
    return w * scale[:, None, None, None], beta - mean * scale


class _KeyGen:
    def __init__(self, key):
        self._key, self._i = key, 0

    def __call__(self):
        k = jax.random.fold_in(self._key, self._i)
        self._i += 1
        return k


def _conv_bn_params(kg, cin, cout, k, pad_cin=True):
    fan_in = cin * k * k
    w = jax.random.normal(kg(), (cout, cin, k, k), jnp.float32) * jnp.sqrt(2.0 / fan_in)
    gamma = jnp.ones((cout,), jnp.float32)   # fresh BatchNorm eval-mode stats
    beta = jnp.zeros((cout,), jnp.float32)
    mean = jnp.zeros((cout,), jnp.float32)
    var = jnp.ones((cout,), jnp.float32)
    w, b = _fold_bn(w, gamma, beta, mean, var)
    Np = _round_up(cout, 128)
    wt = jnp.transpose(w, (2, 3, 1, 0))                     # (kh, kw, cin, cout)
    if pad_cin:
        # Per-tap channel padding so padded activation channels hit zero rows.
        cp = _round_up(cin, 128)
        wt = jnp.pad(wt, ((0, 0), (0, 0), (0, cp - cin), (0, Np - cout)))
        w_pad = wt.reshape(k * k * cp, Np).astype(jnp.bfloat16)
    else:
        wmat = wt.reshape(k * k * cin, cout)
        Kp = _round_up(k * k * cin, 128)
        w_pad = jnp.pad(wmat, ((0, Kp - k * k * cin), (0, Np - cout))
                        ).astype(jnp.bfloat16)
    b_pad = jnp.zeros((1, Np), jnp.float32).at[0, :cout].set(b)
    return {"w": w_pad, "b": b_pad, "k": k}


def _linear_params(kg, fan_in, fan_out):
    # Linear semantics y = x @ W^T + b; stored pre-transposed as (in, out).
    w = jax.random.normal(kg(), (fan_in, fan_out), jnp.float32) * jnp.sqrt(2.0 / fan_in)
    b = jnp.zeros((fan_out,), jnp.float32)
    Kp, Np = _round_up(fan_in, 128), _round_up(fan_out, 128)
    w_pad = jnp.pad(w, ((0, Kp - fan_in), (0, Np - fan_out))).astype(jnp.bfloat16)
    b_pad = jnp.zeros((1, Np), jnp.float32).at[0, :fan_out].set(b)
    return {"w": w_pad, "b": b_pad, "n_out": fan_out}


_RESNET101_LAYERS = ((64, 3, 1), (128, 4, 2), (256, 23, 2), (512, 3, 2))
_EXPANSION = 4


def init_params(key):
    kg = _KeyGen(key)
    # Replaced conv1: 1-channel input, im2col built from the raw (unpadded)
    # image, so K-pad the 49 taps directly (pad_cin=False).
    resnet = {"conv1": _conv_bn_params(kg, 1, 64, 7, pad_cin=False)}
    inplanes = 64
    for li, (planes, nblocks, stride) in enumerate(_RESNET101_LAYERS):
        blocks = []
        for bi in range(nblocks):
            s = stride if bi == 0 else 1
            blk = {
                "stride": s,
                "conv1": _conv_bn_params(kg, inplanes, planes, 1),
                "conv2": _conv_bn_params(kg, planes, planes, 3),
                "conv3": _conv_bn_params(kg, planes, planes * _EXPANSION, 1),
            }
            if s != 1 or inplanes != planes * _EXPANSION:
                blk["downsample"] = _conv_bn_params(kg, inplanes, planes * _EXPANSION, 1)
            blocks.append(blk)
            inplanes = planes * _EXPANSION
        resnet[f"layer{li + 1}"] = blocks
    resnet["fc"] = _linear_params(kg, 512 * _EXPANSION, 1000)
    return {
        "resnet": resnet,
        "FC": _linear_params(kg, 1000, 4096),
        "out1": _linear_params(kg, 4096 + 2, 4096),
        "out2": _linear_params(kg, 4096, 2),
    }


# ----------------------------------------------------------------------------
# Forward pass
# ----------------------------------------------------------------------------
def _conv(x, p, stride, pad, relu, residual=None):
    return conv2d_bias_act(x, p["w"], p["b"], kh=p["k"], kw=p["k"],
                           stride=stride, pad=pad, relu=relu, residual=residual)


def _linear(x, p, relu=False, out_dtype=jnp.bfloat16):
    return matmul_bias_act(x, p["w"], p["b"], relu=relu, out_dtype=out_dtype)


def _bottleneck(x, blk):
    if "downsample" in blk:
        identity = _conv(x, blk["downsample"], stride=blk["stride"], pad=0, relu=False)
    else:
        identity = x
    out = _conv(x, blk["conv1"], stride=1, pad=0, relu=True)
    out = _conv(out, blk["conv2"], stride=blk["stride"], pad=1, relu=True)
    # conv3 + residual add + ReLU fused in the matmul epilogue (residual bf16).
    out = _conv(out, blk["conv3"], stride=1, pad=0, relu=True, residual=identity)
    return out


def _resnet101_forward(params, x_nchw):
    x = jnp.transpose(x_nchw, (0, 2, 3, 1)).astype(jnp.bfloat16)  # NCHW -> NHWC
    x = _conv(x, params["conv1"], stride=2, pad=3, relu=True)     # channels padded to 128
    x = maxpool_3x3_s2_p1(x)
    for li in range(4):
        for blk in params[f"layer{li + 1}"]:
            x = _bottleneck(x, blk)
    x = jnp.mean(x.astype(jnp.float32), axis=(1, 2))               # AdaptiveAvgPool2d((1,1))
    return _linear(x, params["fc"], relu=False)                    # (N, 1024) padded, bf16


def model_forward(params, x, y):
    feat = _resnet101_forward(params["resnet"], x)                 # (N, 1024), cols 1000.. are 0
    feat = feat.reshape(feat.shape[0], -1)                          # torch.flatten(start_dim=1)
    h = _linear(feat, params["FC"], relu=True)                      # Linear(1000,4096)+ReLU
    # TODO(synk): Dropout(0.5) layers are identity here (eval-mode semantics).
    h = jnp.concatenate([h, y.astype(jnp.bfloat16)], axis=1)        # (N, 4098)
    h = _linear(h, params["out1"], relu=True)                       # Linear(4098,4096)+ReLU
    out = matmul_bias_act(h, params["out2"]["w"], params["out2"]["b"],
                          relu=False, out_dtype=jnp.float32)        # Linear(4096,2), f32
    return out[:, :params["out2"]["n_out"]]


if __name__ == "__main__":
    key = jax.random.PRNGKey(0)
    params = init_params(jax.random.fold_in(key, 1))
    # Small shapes consistent with the module: 1-channel grayscale eye image,
    # batch=2, spatial=32 (adaptive avg-pool makes any size >= 32 work), plus
    # the 2-d auxiliary head-pose vector y.
    x = jax.random.normal(jax.random.fold_in(key, 2), (2, 1, 32, 32), jnp.float32)
    y = jax.random.normal(jax.random.fold_in(key, 3), (2, 2), jnp.float32)
    out = model_forward(params, x, y)
    out = jax.block_until_ready(out)
    assert out.shape == (2, 2) and out.dtype == jnp.float32
    print("KERNEL_OK")
</pallas_src>

<mosaic_0001>
module attributes {stable_mosaic.version = 11 : i64} {
  func.func @_mm_kernel(%arg0: i32, %arg1: i32, %arg2: i32, %arg3: memref<256x128xbf16, #tpu.memory_space<vmem>>, %arg4: memref<128x128xbf16, #tpu.memory_space<vmem>>, %arg5: memref<1x128xf32, #tpu.memory_space<vmem>>, %arg6: memref<256x128xbf16, #tpu.memory_space<vmem>>, %arg7: memref<256x128xf32, #tpu.memory_space<vmem>>) attributes {dimension_semantics = [#tpu.dimension_semantics<parallel>, #tpu.dimension_semantics<parallel>, #tpu.dimension_semantics<arbitrary>], iteration_bounds = array<i64: 2, 1, 1>, scalar_prefetch = 0 : i64, scratch_operands = 1 : i64, tpu.core_type = #tpu.core_type<tc>, window_params = [{transform_indices = @transform_0, window_bounds = array<i64: 256, 128>}, {transform_indices = @transform_1, window_bounds = array<i64: 128, 128>}, {transform_indices = @transform_2, window_bounds = array<i64: 1, 128>}, {transform_indices = @transform_3, window_bounds = array<i64: 256, 128>}]} {
    %c0_i32 = arith.constant 0 : i32
    %0 = arith.cmpi eq, %arg2, %c0_i32 : i32
    %1 = arith.extui %0 : i1 to i32
    %c0_i32_0 = arith.constant 0 : i32
    %2 = arith.cmpi ne, %1, %c0_i32_0 : i32
    scf.if %2 {
      %cst_10 = arith.constant 0.000000e+00 : f32
      %12 = vector.broadcast %cst_10 : f32 to vector<256x128xf32>
      %c0_11 = arith.constant 0 : index
      %c0_12 = arith.constant 0 : index
      %13 = vector.load %arg7[%c0_11, %c0_12] : memref<256x128xf32, #tpu.memory_space<vmem>>, vector<256x128xf32>
      tpu.vector_store %arg7[%c0_11, %c0_12], %12 {strides = array<i32>} : memref<256x128xf32, #tpu.memory_space<vmem>>, vector<256x128xf32>,
    } else {
    }
    %c0 = arith.constant 0 : index
    %c0_1 = arith.constant 0 : index
    %3 = vector.load %arg7[%c0, %c0_1] : memref<256x128xf32, #tpu.memory_space<vmem>>, vector<256x128xf32>
    %c0_2 = arith.constant 0 : index
    %c0_3 = arith.constant 0 : index
    %4 = vector.load %arg3[%c0_2, %c0_3] : memref<256x128xbf16, #tpu.memory_space<vmem>>, vector<256x128xbf16>
    %c0_4 = arith.constant 0 : index
    %c0_5 = arith.constant 0 : index
    %5 = vector.load %arg4[%c0_4, %c0_5] : memref<128x128xbf16, #tpu.memory_space<vmem>>, vector<128x128xbf16>
    %cst = arith.constant dense<0.000000e+00> : vector<256x128xf32>
    %6 = tpu.matmul %4, %5, %cst {dimension_numbers = #tpu.dot_dimension_numbers<[1], [0], [0], [1], [0, 0, 1, 1], [], []>} : vector<256x128xbf16>, vector<128x128xbf16>, vector<256x128xf32> -> vector<256x128xf32>
    %7 = arith.addf %3, %6 : vector<256x128xf32>
    %c0_6 = arith.constant 0 : index
    %c0_7 = arith.constant 0 : index
    %8 = vector.load %arg7[%c0_6, %c0_7] : memref<256x128xf32, #tpu.memory_space<vmem>>, vector<256x128xf32>
    tpu.vector_store %arg7[%c0_6, %c0_7], %7 {strides = array<i32>} : memref<256x128xf32, #tpu.memory_space<vmem>>, vector<256x128xf32>,
    %c0_i32_8 = arith.constant 0 : i32
    %9 = arith.cmpi eq, %arg2, %c0_i32_8 : i32
    %10 = arith.extui %9 : i1 to i32
    %c0_i32_9 = arith.constant 0 : i32
    %11 = arith.cmpi ne, %10, %c0_i32_9 : i32
    scf.if %11 {
      %c0_10 = arith.constant 0 : index
      %c0_11 = arith.constant 0 : index
      %12 = vector.load %arg7[%c0_10, %c0_11] : memref<256x128xf32, #tpu.memory_space<vmem>>, vector<256x128xf32>
      %c0_12 = arith.constant 0 : index
      %c0_13 = arith.constant 0 : index
      %13 = vector.load %arg5[%c0_12, %c0_13] : memref<1x128xf32, #tpu.memory_space<vmem>>, vector<1x128xf32>
      %14 = vector.broadcast %13 : vector<1x128xf32> to vector<256x128xf32>
      %15 = arith.addf %12, %14 : vector<256x128xf32>
      %cst_14 = arith.constant 0.000000e+00 : f32
      %16 = vector.broadcast %cst_14 : f32 to vector<256x128xf32>
      %17 = arith.maximumf %15, %16 : vector<256x128xf32>
      %18 = arith.truncf %17 : vector<256x128xf32> to vector<256x128xbf16>
      %c0_15 = arith.constant 0 : index
      %c0_16 = arith.constant 0 : index
      %19 = vector.load %arg6[%c0_15, %c0_16] : memref<256x128xbf16, #tpu.memory_space<vmem>>, vector<256x128xbf16>
      tpu.vector_store %arg6[%c0_15, %c0_16], %18 {strides = array<i32>} : memref<256x128xbf16, #tpu.memory_space<vmem>>, vector<256x128xbf16>,
    } else {
    }
    return
  }
  func.func @transform_0(%arg0: i32, %arg1: i32, %arg2: i32) -> (i32, i32) {
    %c0_i32 = arith.constant 0 : i32
    return %arg0, %arg2 : i32, i32
  }
  func.func @transform_1(%arg0: i32, %arg1: i32, %arg2: i32) -> (i32, i32) {
    %c0_i32 = arith.constant 0 : i32
    return %arg2, %arg1 : i32, i32
  }
  func.func @transform_2(%arg0: i32, %arg1: i32, %arg2: i32) -> (i32, i32) {
    %c0_i32 = arith.constant 0 : i32
    %c0_i32_0 = arith.constant 0 : i32
    return %c0_i32, %arg1 : i32, i32
  }
  func.func @transform_3(%arg0: i32, %arg1: i32, %arg2: i32) -> (i32, i32) {
    %c0_i32 = arith.constant 0 : i32
    return %arg0, %arg1 : i32, i32
  }
}

</mosaic_0001>

<llo_original>
// kernel: matmul_bias_act.1
$region0: #{matmul_bias_act.1}
  #allocation0 [shape = 'u32[]', space=smem, size = 0x4, offset = 0x4, fixed_abs, tag = 'smem constant byte address 0x4 - core index']
  #allocation1 [shape = 'u32[144,128]{1,0:T(1,128)}', space=vmem, size = 0x12000, scoped, tag = 'internal scratch']
  #allocation2 [shape = 'f32[256,128]{1,0:T(8,128)}', space=vmem, size = 0x20000, scoped, tag = 'scratch operand']
  %s0 = inlined_call_operand.vmem [shape: bf16[512,128], index: 0, kind: input, shape index: {}]
  %s1 = inlined_call_operand.vmem [shape: bf16[128,128], index: 1, kind: input, shape index: {}]
  %s2 = inlined_call_operand.vmem [shape: f32[1,128], index: 2, kind: input, shape index: {}]
  %s3 = inlined_call_operand.hbm [shape: bf16[512,128], index: 3, kind: output, shape index: {}]
  %s4 = sld [smem:[#allocation0]]
  $region53: #{matmul_bias_act.1} parent=0
    _
  %s6 = ssub.s32 1, %s4
  %s7 = scalar_select 0, %s6, %s4
  $region1: #{matmul_bias_act.1} parent=0
    #allocation3 [shape = 'u8[131072]{0}', space=vmem, size = 0x20000, scoped, tag = 'output window, operand 0']
    #allocation4 [shape = 's32[2]{0}', space=sflag, size = 0x8, scoped, tag = 'scoped memory for matmul_bias_act.1']
    %8 = vsyncpa [#allocation4], 0
    %s9 = scalar_lea.sflag [#allocation4], 1
    %10 = vsyncpa %s9, 0
    loop: start=0, step=1, limit=4
    $region2: #{matmul_bias_act.1} parent=1 // loop_pre_header
      _
    $region3: #{matmul_bias_act.1} parent=1 // loop_header
      %s12 = sphi 0, %s16
      %p13 = scmp.ge.s32.totalorder %s12, 4
      %s19 = sphi 0, %s38
      %s20 = sphi 0, %s34
      %s21 = sphi 0, %s30
      %s22 = sphi 0, %s19
      %s23 = sphi 0, %s20
      %s24 = sphi 0, %s21
      %s25 = sphi 0, %s22
      %s26 = sphi 0, %s23
      %s27 = sphi 0, %s24
      %s43 = sphi 0, %s45
      %s46 = sphi 0, %s43
      %s47 = sphi 0, %s46
      %s63 = sphi 0, %s47
      %s71 = sphi 0, %s73
      %s74 = sphi 0, %s71
      %s75 = sphi 0, %s74
      %s91 = sphi 0, %s75
      %s97 = sphi 0, %s99
      %s100 = sphi 0, %s97
      %s101 = sphi 0, %s100
      %s117 = sphi 0, %s101
      %s125 = sphi 0, %s127
      %s128 = sphi 0, %s125
      %s129 = sphi 0, %s128
      %s145 = sphi 0, %s129
    $region4: #{matmul_bias_act.1} parent=1 // loop_header_branch
      %15 = sbr.rel (%p13) target = $region8
    $region5: #{matmul_bias_act.1} parent=1 // loop_body
      %s17 = ssub.s32 %s12, 1
      %s18 = ssub.s32 %s12, 2
      %s28 = sadd.s32 1, %s21
      %p29 = scmp.ge.s32.totalorder %s28, 1
      %s30 = scalar_select %p29, 0, %s28
      %s31 = sadd.s32 1, %s20
      %s32 = scalar_select %p29, %s31, %s20
      %p33 = scmp.ge.s32.totalorder %s32, 1
      %s34 = scalar_select %p33, 0, %s32
      %s35 = sadd.s32 1, %s19
      %s36 = scalar_select %p33, %s35, %s19
      %p37 = scmp.ge.s32.totalorder %s36, 2
      %s38 = scalar_select %p37, 0, %s36
      %s39 = ssub.s32 %s19, %s38
      %s40 = ssub.s32 %s21, %s30
      %s41 = sor.u32 %s39, %s40
      %p42 = scmp.eq.s32.totalorder %s41, 0
      %s44 = sadd.s32 %s43, 1
      %s45 = scalar_select %p42, %s43, %s44
      %p48 = pneg %p42
      %p49 = scmp.eq.s32.totalorder %s12, 1
      %p50 = por %p48, %p49
      %p51 = scmp.ne.s32.totalorder %s43, %s46
      %p52 = scmp.eq.s32.totalorder %s12, 0
      %p53 = por %p51, %p52
      %p54 = scmp.ne.s32.totalorder %s43, %s46
      %p55 = scmp.eq.s32.totalorder %s17, 1
      %p56 = por %p54, %p55
      %p57 = scmp.ne.s32.totalorder %s46, %s47
      %p58 = scmp.eq.s32.totalorder %s17, 0
      %p59 = por %p57, %p58
      %p60 = scmp.ne.s32.totalorder %s46, %s47
      %p61 = scmp.eq.s32.totalorder %s18, 1
      %p62 = por %p60, %p61
      %p64 = scmp.ne.s32.totalorder %s47, %s63
      %p65 = scmp.eq.s32.totalorder %s18, 0
      %p66 = por %p64, %p65
      %s67 = ssub.s32 %s21, %s30
      %s68 = ssub.s32 %s20, %s34
      %s69 = sor.u32 %s67, %s68
      %p70 = scmp.eq.s32.totalorder %s69, 0
      %s72 = sadd.s32 %s71, 1
      %s73 = scalar_select %p70, %s71, %s72
      %p76 = pneg %p70
      %p77 = scmp.eq.s32.totalorder %s12, 1
      %p78 = por %p76, %p77
      %p79 = scmp.ne.s32.totalorder %s71, %s74
      %p80 = scmp.eq.s32.totalorder %s12, 0
      %p81 = por %p79, %p80
      %p82 = scmp.ne.s32.totalorder %s71, %s74
      %p83 = scmp.eq.s32.totalorder %s17, 1
      %p84 = por %p82, %p83
      %p85 = scmp.ne.s32.totalorder %s74, %s75
      %p86 = scmp.eq.s32.totalorder %s17, 0
      %p87 = por %p85, %p86
      %p88 = scmp.ne.s32.totalorder %s74, %s75
      %p89 = scmp.eq.s32.totalorder %s18, 1
      %p90 = por %p88, %p89
      %p92 = scmp.ne.s32.totalorder %s75, %s91
      %p93 = scmp.eq.s32.totalorder %s18, 0
      %p94 = por %p92, %p93
      %s95 = ssub.s32 %s20, %s34
      %p96 = scmp.eq.s32.totalorder %s95, 0
      %s98 = sadd.s32 %s97, 1
      %s99 = scalar_select %p96, %s97, %s98
      %p102 = pneg %p96
      %p103 = scmp.eq.s32.totalorder %s12, 1
      %p104 = por %p102, %p103
      %p105 = scmp.ne.s32.totalorder %s97, %s100
      %p106 = scmp.eq.s32.totalorder %s12, 0
      %p107 = por %p105, %p106
      %p108 = scmp.ne.s32.totalorder %s97, %s100
      %p109 = scmp.eq.s32.totalorder %s17, 1
      %p110 = por %p108, %p109
      %p111 = scmp.ne.s32.totalorder %s100, %s101
      %p112 = scmp.eq.s32.totalorder %s17, 0
      %p113 = por %p111, %p112
      %p114 = scmp.ne.s32.totalorder %s100, %s101
      %p115 = scmp.eq.s32.totalorder %s18, 1
      %p116 = por %p114, %p115
      %p118 = scmp.ne.s32.totalorder %s101, %s117
      %p119 = scmp.eq.s32.totalorder %s18, 0
      %p120 = por %p118, %p119
      %s121 = ssub.s32 %s19, %s38
      %s122 = ssub.s32 %s20, %s34
      %s123 = sor.u32 %s121, %s122
      %p124 = scmp.eq.s32.totalorder %s123, 0
      %s126 = sadd.s32 %s125, 1
      %s127 = scalar_select %p124, %s125, %s126
      %p130 = pneg %p124
      %p131 = scmp.eq.s32.totalorder %s12, 1
      %p132 = por %p130, %p131
      %p133 = scmp.ne.s32.totalorder %s125, %s128
      %p134 = scmp.eq.s32.totalorder %s12, 0
      %p135 = por %p133, %p134
      %p136 = scmp.ne.s32.totalorder %s125, %s128
      %p137 = scmp.eq.s32.totalorder %s17, 1
      %p138 = por %p136, %p137
      %p139 = scmp.ne.s32.totalorder %s128, %s129
      %p140 = scmp.eq.s32.totalorder %s17, 0
      %p141 = por %p139, %p140
      %p142 = scmp.ne.s32.totalorder %s128, %s129
      %p143 = scmp.eq.s32.totalorder %s18, 1
      %p144 = por %p142, %p143
      %p146 = scmp.ne.s32.totalorder %s129, %s145
      %p147 = scmp.eq.s32.totalorder %s18, 0
      %p148 = por %p146, %p147
      %p149 = scmp.le.s32.totalorder 1, %s12
      %p150 = scmp.lt.s32.totalorder %s12, 3
      %p151 = pnand %p149, %p150
      %p152 = pneg %p151
      // Predicated region
      $region9: #{matmul_bias_act.1} parent=5 // pred_check
        _
      $region10: #{matmul_bias_act.1} parent=5 // pred_check_branch
        %154 = sbr.rel (%p151) target = $region12
      $region11: #{matmul_bias_act.1} parent=5 // pred_region
        %s155 = ssub.s32 %s12, 1
        // Predicated region
        $region13: #{matmul_bias_act.1} parent=11 // pred_check
          %p156 = pneg %p87
        $region14: #{matmul_bias_act.1} parent=11 // pred_check_branch
          %158 = sbr.rel (%p156) target = $region16
        $region15: #{matmul_bias_act.1} parent=11 // pred_region
          %s159 = smul.u32 16, %s24
          %p160 = scmp.lt.s32.totalorder %s159, 15
          %s161 = scalar_select %p160, %s159, 15
          %p162 = scmp.lt.s32.totalorder %s23, 0
          %s163 = scalar_select %p162, %s23, 0
          %s164 = sadd.s32 %s163, %s161
          %s165 = smul.addr %s164, 4
          %s166 = scalar_lea.vmem %s1, %s165
          %s167 = smul.u32 16, %s24
        $region16: #{matmul_bias_act.1} parent=11 // pred_fallthru
          _
        // Predicated region
        $region17: #{matmul_bias_act.1} parent=11 // pred_check
          %p168 = pneg %p113
        $region18: #{matmul_bias_act.1} parent=11 // pred_check_branch
          %170 = sbr.rel (%p168) target = $region20
        $region19: #{matmul_bias_act.1} parent=11 // pred_region
          %p171 = scmp.lt.s32.totalorder %s23, 0
          %s172 = scalar_select %p171, %s23, 0
          %s173 = scalar_lea.vmem %s2, %s172
        $region20: #{matmul_bias_act.1} parent=11 // pred_fallthru
          _
      $region12: #{matmul_bias_act.1} parent=5 // pred_fallthru
        _
      %p174 = scmp.lt.s32.totalorder %s12, 2
      // Predicated region
      $region21: #{matmul_bias_act.1} parent=5 // pred_check
        %p175 = pneg %p174
      $region22: #{matmul_bias_act.1} parent=5 // pred_check_branch
        %177 = sbr.rel (%p175) target = $region24
      $region23: #{matmul_bias_act.1} parent=5 // pred_region
        // Predicated region
        $region25: #{matmul_bias_act.1} parent=23 // pred_check
          %p178 = pneg %p53
        $region26: #{matmul_bias_act.1} parent=23 // pred_check_branch
          %180 = sbr.rel (%p178) target = $region28
        $region27: #{matmul_bias_act.1} parent=23 // pred_region
          %s181 = smul.u32 32, %s19
          %p182 = scmp.lt.s32.totalorder %s181, 63
          %s183 = scalar_select %p182, %s181, 63
          %p184 = scmp.lt.s32.totalorder %s21, 0
          %s185 = scalar_select %p184, %s21, 0
          %s186 = sadd.s32 %s185, %s183
          %s187 = smul.addr %s186, 4
          %s188 = scalar_lea.vmem %s0, %s187
          %s189 = smul.u32 32, %s19
        $region28: #{matmul_bias_act.1} parent=23 // pred_fallthru
          _
      $region24: #{matmul_bias_act.1} parent=5 // pred_fallthru
        _
      %p190 = scmp.le.s32.totalorder 1, %s12
      %p191 = scmp.lt.s32.totalorder %s12, 3
      %p192 = pnand %p190, %p191
      %p193 = pneg %p192
      // Predicated region
      $region29: #{matmul_bias_act.1} parent=5 // pred_check
        _
      $region30: #{matmul_bias_act.1} parent=5 // pred_check_branch
        %195 = sbr.rel (%p192) target = $region32
      $region31: #{matmul_bias_act.1} parent=5 // pred_region
        %s196 = ssub.s32 %s12, 1
        %s197 = smul.u32 32, %s22
        %p198 = scmp.lt.s32.totalorder %s197, 63
        %s199 = scalar_select %p198, %s197, 63
        %p200 = scmp.lt.s32.totalorder %s24, 0
        %s201 = scalar_select %p200, %s24, 0
        %s202 = sadd.s32 %s201, %s199
        %s203 = smul.addr %s202, 4
        %s204 = scalar_lea.vmem %s0, %s203
        %p205 = pneg %p59
        %p206 = pneg %p56
        %s207 = smul.u32 16, %s24
        %p208 = scmp.lt.s32.totalorder %s207, 15
        %s209 = scalar_select %p208, %s207, 15
        %p210 = scmp.lt.s32.totalorder %s23, 0
        %s211 = scalar_select %p210, %s23, 0
        %s212 = sadd.s32 %s211, %s209
        %s213 = smul.addr %s212, 4
        %s214 = scalar_lea.vmem %s1, %s213
        %p215 = pneg %p87
        %p216 = pneg %p84
        %p217 = scmp.lt.s32.totalorder %s23, 0
        %s218 = scalar_select %p217, %s23, 0
        %s219 = scalar_lea.vmem %s2, %s218
        %p220 = pneg %p113
        %p221 = pneg %p110
        %p222 = pneg %p141
        %p223 = pneg %p138
        %s224 = sand.u32 %s128, 1
        %s225 = scalar_lea.sflag [#allocation4], %s224
        %s226 = sand.u32 %s128, 1
        %s227 = smul.addr %s226, 128
        %s228 = scalar_lea.vmem [#allocation3], %s227
        %s229 = smul.u32 32, %s22
        %p230 = scmp.lt.s32.totalorder %s229, 63
        %s231 = scalar_select %p230, %s229, 63
        %p232 = scmp.lt.s32.totalorder %s24, 0
        %s233 = scalar_select %p232, %s24, 0
        %s234 = sadd.s32 %s233, %s231
        %s235 = smul.addr %s234, 4
        %s236 = scalar_lea.vmem %s0, %s235
        %s237 = smul.u32 32, %s22
        %s238 = smul.u32 16, %s24
        %p239 = scmp.lt.s32.totalorder %s238, 15
        %s240 = scalar_select %p239, %s238, 15
        %p241 = scmp.lt.s32.totalorder %s23, 0
        %s242 = scalar_select %p241, %s23, 0
        %s243 = sadd.s32 %s242, %s240
        %s244 = smul.addr %s243, 4
        %s245 = scalar_lea.vmem %s1, %s244
        %s246 = smul.u32 16, %s24
        %p247 = scmp.lt.s32.totalorder %s23, 0
        %s248 = scalar_select %p247, %s23, 0
        %s249 = scalar_lea.vmem %s2, %s248
        %s250 = smul.u32 32, %s22
        %p252 = scmp.eq.s32.totalorder %s24, 0
        // Predicated region
        $region33: #{matmul_bias_act.1} parent=31 // pred_check
          %p253 = pneg %p252
        $region34: #{matmul_bias_act.1} parent=31 // pred_check_branch
          %255 = sbr.rel (%p253) target = $region36
        $region35: #{matmul_bias_act.1} parent=31 // pred_region
          %256 = vst [vmem:[#allocation2] sm:$0xff] 0.0
          %257 = vst [vmem:[#allocation2 + $0x8] sm:$0xff] 0.0
          %258 = vst [vmem:[#allocation2 + $0x10] sm:$0xff] 0.0
          %259 = vst [vmem:[#allocation2 + $0x18] sm:$0xff] 0.0
          %260 = vst [vmem:[#allocation2 + $0x20] sm:$0xff] 0.0
          %261 = vst [vmem:[#allocation2 + $0x28] sm:$0xff] 0.0
          %262 = vst [vmem:[#allocation2 + $0x30] sm:$0xff] 0.0
          %263 = vst [vmem:[#allocation2 + $0x38] sm:$0xff] 0.0
          %264 = vst [vmem:[#allocation2 + $0x40] sm:$0xff] 0.0
          %265 = vst [vmem:[#allocation2 + $0x48] sm:$0xff] 0.0
          %266 = vst [vmem:[#allocation2 + $0x50] sm:$0xff] 0.0
          %267 = vst [vmem:[#allocation2 + $0x58] sm:$0xff] 0.0
          %268 = vst [vmem:[#allocation2 + $0x60] sm:$0xff] 0.0
          %269 = vst [vmem:[#allocation2 + $0x68] sm:$0xff] 0.0
          %270 = vst [vmem:[#allocation2 + $0x70] sm:$0xff] 0.0
          %271 = vst [vmem:[#allocation2 + $0x78] sm:$0xff] 0.0
          %272 = vst [vmem:[#allocation2 + $0x80] sm:$0xff] 0.0
          %273 = vst [vmem:[#allocation2 + $0x88] sm:$0xff] 0.0
          %274 = vst [vmem:[#allocation2 + $0x90] sm:$0xff] 0.0
          %275 = vst [vmem:[#allocation2 + $0x98] sm:$0xff] 0.0
          %276 = vst [vmem:[#allocation2 + $0xa0] sm:$0xff] 0.0
          %277 = vst [vmem:[#allocation2 + $0xa8] sm:$0xff] 0.0
          %278 = vst [vmem:[#allocation2 + $0xb0] sm:$0xff] 0.0
          %279 = vst [vmem:[#allocation2 + $0xb8] sm:$0xff] 0.0
          %280 = vst [vmem:[#allocation2 + $0xc0] sm:$0xff] 0.0
          %281 = vst [vmem:[#allocation2 + $0xc8] sm:$0xff] 0.0
          %282 = vst [vmem:[#allocation2 + $0xd0] sm:$0xff] 0.0
          %283 = vst [vmem:[#allocation2 + $0xd8] sm:$0xff] 0.0
          %284 = vst [vmem:[#allocation2 + $0xe0] sm:$0xff] 0.0
          %285 = vst [vmem:[#allocation2 + $0xe8] sm:$0xff] 0.0
          %286 = vst [vmem:[#allocation2 + $0xf0] sm:$0xff] 0.0
          %287 = vst [vmem:[#allocation2 + $0xf8] sm:$0xff] 0.0
        $region36: #{matmul_bias_act.1} parent=31 // pred_fallthru
          _
        %v288 = vld [vmem:[#allocation2] sm:$0xff]
        %v289 = vld [vmem:[#allocation2 + $0x8] sm:$0xff]
        %v290 = vld [vmem:[#allocation2 + $0x10] sm:$0xff]
        %v291 = vld [vmem:[#allocation2 + $0x18] sm:$0xff]
        %v292 = vld [vmem:[#allocation2 + $0x20] sm:$0xff]
        %v293 = vld [vmem:[#allocation2 + $0x28] sm:$0xff]
        %v294 = vld [vmem:[#allocation2 + $0x30] sm:$0xff]
        %v295 = vld [vmem:[#allocation2 + $0x38] sm:$0xff]
        %v296 = vld [vmem:[#allocation2 + $0x40] sm:$0xff]
        %v297 = vld [vmem:[#allocation2 + $0x48] sm:$0xff]
        %v298 = vld [vmem:[#allocation2 + $0x50] sm:$0xff]
        %v299 = vld [vmem:[#allocation2 + $0x58] sm:$0xff]
        %v300 = vld [vmem:[#allocation2 + $0x60] sm:$0xff]
        %v301 = vld [vmem:[#allocation2 + $0x68] sm:$0xff]
        %v302 = vld [vmem:[#allocation2 + $0x70] sm:$0xff]
        %v303 = vld [vmem:[#allocation2 + $0x78] sm:$0xff]
        %v304 = vld [vmem:[#allocation2 + $0x80] sm:$0xff]
        %v305 = vld [vmem:[#allocation2 + $0x88] sm:$0xff]
        %v306 = vld [vmem:[#allocation2 + $0x90] sm:$0xff]
        %v307 = vld [vmem:[#allocation2 + $0x98] sm:$0xff]
        %v308 = vld [vmem:[#allocation2 + $0xa0] sm:$0xff]
        %v309 = vld [vmem:[#allocation2 + $0xa8] sm:$0xff]
        %v310 = vld [vmem:[#allocation2 + $0xb0] sm:$0xff]
        %v311 = vld [vmem:[#allocation2 + $0xb8] sm:$0xff]
        %v312 = vld [vmem:[#allocation2 + $0xc0] sm:$0xff]
        %v313 = vld [vmem:[#allocation2 + $0xc8] sm:$0xff]
        %v314 = vld [vmem:[#allocation2 + $0xd0] sm:$0xff]
        %v315 = vld [vmem:[#allocation2 + $0xd8] sm:$0xff]
        %v316 = vld [vmem:[#allocation2 + $0xe0] sm:$0xff]
        %v317 = vld [vmem:[#allocation2 + $0xe8] sm:$0xff]
        %v318 = vld [vmem:[#allocation2 + $0xf0] sm:$0xff]
        %v319 = vld [vmem:[#allocation2 + $0xf8] sm:$0xff]
        %v320 = vld [vmem:[%s236] sm:$0xf]
        %v321 = vld [vmem:[%s236 + $0x4] sm:$0xf]
        %v322 = vld [vmem:[%s236 + $0x8] sm:$0xf]
        %v323 = vld [vmem:[%s236 + $0xc] sm:$0xf]
        %v324 = vld [vmem:[%s236 + $0x10] sm:$0xf]
        %v325 = vld [vmem:[%s236 + $0x14] sm:$0xf]
        %v326 = vld [vmem:[%s236 + $0x18] sm:$0xf]
        %v327 = vld [vmem:[%s236 + $0x1c] sm:$0xf]
        %v328 = vld [vmem:[%s236 + $0x20] sm:$0xf]
        %v329 = vld [vmem:[%s236 + $0x24] sm:$0xf]
        %v330 = vld [vmem:[%s236 + $0x28] sm:$0xf]
        %v331 = vld [vmem:[%s236 + $0x2c] sm:$0xf]
        %v332 = vld [vmem:[%s236 + $0x30] sm:$0xf]
        %v333 = vld [vmem:[%s236 + $0x34] sm:$0xf]
        %v334 = vld [vmem:[%s236 + $0x38] sm:$0xf]
        %v335 = vld [vmem:[%s236 + $0x3c] sm:$0xf]
        %v336 = vld [vmem:[%s236 + $0x40] sm:$0xf]
        %v337 = vld [vmem:[%s236 + $0x44] sm:$0xf]
        %v338 = vld [vmem:[%s236 + $0x48] sm:$0xf]
        %v339 = vld [vmem:[%s236 + $0x4c] sm:$0xf]
        %v340 = vld [vmem:[%s236 + $0x50] sm:$0xf]
        %v341 = vld [vmem:[%s236 + $0x54] sm:$0xf]
        %v342 = vld [vmem:[%s236 + $0x58] sm:$0xf]
        %v343 = vld [vmem:[%s236 + $0x5c] sm:$0xf]
        %v344 = vld [vmem:[%s236 + $0x60] sm:$0xf]
        %v345 = vld [vmem:[%s236 + $0x64] sm:$0xf]
        %v346 = vld [vmem:[%s236 + $0x68] sm:$0xf]
        %v347 = vld [vmem:[%s236 + $0x6c] sm:$0xf]
        %v348 = vld [vmem:[%s236 + $0x70] sm:$0xf]
        %v349 = vld [vmem:[%s236 + $0x74] sm:$0xf]
        %v350 = vld [vmem:[%s236 + $0x78] sm:$0xf]
        %v351 = vld [vmem:[%s236 + $0x7c] sm:$0xf]
        %v352 = vld [vmem:[%s245] sm:$0xf]
        %v353 = vld [vmem:[%s245 + $0x4] sm:$0xf]
        %v354 = vld [vmem:[%s245 + $0x8] sm:$0xf]
        %v355 = vld [vmem:[%s245 + $0xc] sm:$0xf]
        %v356 = vld [vmem:[%s245 + $0x10] sm:$0xf]
        %v357 = vld [vmem:[%s245 + $0x14] sm:$0xf]
        %v358 = vld [vmem:[%s245 + $0x18] sm:$0xf]
        %v359 = vld [vmem:[%s245 + $0x1c] sm:$0xf]
        %v360 = vld [vmem:[%s245 + $0x20] sm:$0xf]
        %v361 = vld [vmem:[%s245 + $0x24] sm:$0xf]
        %v362 = vld [vmem:[%s245 + $0x28] sm:$0xf]
        %v363 = vld [vmem:[%s245 + $0x2c] sm:$0xf]
        %v364 = vld [vmem:[%s245 + $0x30] sm:$0xf]
        %v365 = vld [vmem:[%s245 + $0x34] sm:$0xf]
        %v366 = vld [vmem:[%s245 + $0x38] sm:$0xf]
        %v367 = vld [vmem:[%s245 + $0x3c] sm:$0xf]
        %v400 = vunpack.c.l.b16 %v320
        %v401 = vunpack.c.l.b16 %v321
        %v402 = vunpack.c.l.b16 %v322
        %v403 = vunpack.c.l.b16 %v323
        %v404 = vunpack.c.l.b16 %v324
        %v405 = vunpack.c.l.b16 %v325
        %v406 = vunpack.c.l.b16 %v326
        %v407 = vunpack.c.l.b16 %v327
        %v408 = vunpack.c.l.b16 %v328
        %v409 = vunpack.c.l.b16 %v329
        %v410 = vunpack.c.l.b16 %v330
        %v411 = vunpack.c.l.b16 %v331
        %v412 = vunpack.c.l.b16 %v332
        %v413 = vunpack.c.l.b16 %v333
        %v414 = vunpack.c.l.b16 %v334
        %v415 = vunpack.c.l.b16 %v335
        %v416 = vunpack.c.l.b16 %v336
        %v417 = vunpack.c.l.b16 %v337
        %v418 = vunpack.c.l.b16 %v338
        %v419 = vunpack.c.l.b16 %v339
        %v420 = vunpack.c.l.b16 %v340
        %v421 = vunpack.c.l.b16 %v341
        %v422 = vunpack.c.l.b16 %v342
        %v423 = vunpack.c.l.b16 %v343
        %v424 = vunpack.c.l.b16 %v344
        %v425 = vunpack.c.l.b16 %v345
        %v426 = vunpack.c.l.b16 %v346
        %v427 = vunpack.c.l.b16 %v347
        %v428 = vunpack.c.l.b16 %v348
        %v429 = vunpack.c.l.b16 %v349
        %v430 = vunpack.c.l.b16 %v350
        %v431 = vunpack.c.l.b16 %v351
        %v432 = vpack.c.b16 %v401, %v400
        %v433 = vpack.c.b16 %v403, %v402
        %v434 = vpack.c.b16 %v405, %v404
        %v435 = vpack.c.b16 %v407, %v406
        %v436 = vpack.c.b16 %v409, %v408
        %v437 = vpack.c.b16 %v411, %v410
        %v438 = vpack.c.b16 %v413, %v412
        %v439 = vpack.c.b16 %v415, %v414
        %v440 = vpack.c.b16 %v417, %v416
        %v441 = vpack.c.b16 %v419, %v418
        %v442 = vpack.c.b16 %v421, %v420
        %v443 = vpack.c.b16 %v423, %v422
        %v444 = vpack.c.b16 %v425, %v424
        %v445 = vpack.c.b16 %v427, %v426
        %v446 = vpack.c.b16 %v429, %v428
        %v447 = vpack.c.b16 %v431, %v430
        %v480 = vunpack.c.l.b16 %v352
        %v481 = vunpack.c.l.b16 %v353
        %v482 = vunpack.c.l.b16 %v354
        %v483 = vunpack.c.l.b16 %v355
        %v484 = vunpack.c.l.b16 %v356
        %v485 = vunpack.c.l.b16 %v357
        %v486 = vunpack.c.l.b16 %v358
        %v487 = vunpack.c.l.b16 %v359
        %v488 = vunpack.c.l.b16 %v360
        %v489 = vunpack.c.l.b16 %v361
        %v490 = vunpack.c.l.b16 %v362
        %v491 = vunpack.c.l.b16 %v363
        %v492 = vunpack.c.l.b16 %v364
        %v493 = vunpack.c.l.b16 %v365
        %v494 = vunpack.c.l.b16 %v366
        %v495 = vunpack.c.l.b16 %v367
        %v496 = vpack.c.b16 %v481, %v480
        %v497 = vpack.c.b16 %v483, %v482
        %v498 = vpack.c.b16 %v485, %v484
        %v499 = vpack.c.b16 %v487, %v486
        %v500 = vpack.c.b16 %v489, %v488
        %v501 = vpack.c.b16 %v491, %v490
        %v502 = vpack.c.b16 %v493, %v492
        %v503 = vpack.c.b16 %v495, %v494
        %512 = vmatprep.subr.bf16.mxu0 0
        %513 = vmatpush1.bf16.msra.mxu0 %v496
        %514 = vmatprep.subr.bf16.mxu0 0
        %515 = vmatpush1.bf16.msra.mxu0 %v497
        %516 = vmatprep.subr.bf16.mxu0 0
        %517 = vmatpush1.bf16.msra.mxu0 %v498
        %518 = vmatprep.subr.bf16.mxu0 0
        %519 = vmatpush1.bf16.msra.mxu0 %v499
        %520 = vmatprep.subr.bf16.mxu0 0
        %521 = vmatpush1.bf16.msra.mxu0 %v500
        %522 = vmatprep.subr.bf16.mxu0 0
        %523 = vmatpush1.bf16.msra.mxu0 %v501
        %524 = vmatprep.subr.bf16.mxu0 0
        %525 = vmatpush1.bf16.msra.mxu0 %v502
        %526 = vmatprep.subr.bf16.mxu0 0
        %527 = vmatpush1.bf16.msra.mxu0 %v503
        %528 = vmatprep.subr.bf16.mxu0 0
        %529 = vmatpush1.bf16.msra.mxu0 0
        %530 = vmatprep.subr.bf16.mxu0 0
        %531 = vmatpush1.bf16.msra.mxu0 0
        %532 = vmatprep.subr.bf16.mxu0 0
        %533 = vmatpush1.bf16.msra.mxu0 0
        %534 = vmatprep.subr.bf16.mxu0 0
        %535 = vmatpush1.bf16.msra.mxu0 0
        %536 = vmatprep.subr.bf16.mxu0 0
        %537 = vmatpush1.bf16.msra.mxu0 0
        %538 = vmatprep.subr.bf16.mxu0 0
        %539 = vmatpush1.bf16.msra.mxu0 0
        %540 = vmatprep.subr.bf16.mxu0 0
        %541 = vmatpush1.bf16.msra.mxu0 0
        %542 = vmatprep.subr.bf16.mxu0 0
        %543 = vmatpush1.bf16.msra.mxu0 0
        %544 = vmatprep.mubr.bf16.mxu0 0
        %545 = vmatmul.mubr.bf16.gmra.mrb[0].mxu0 %v432
        %v546 = vpop.f32.mrb[0].mxu0
        %v547 = vadd.f32 0.0, %v546
        %v548 = vpop.f32.mrb[0].mxu0
        %v549 = vpop.f32.mrb[0].mxu0
        %v550 = vadd.f32 0.0, %v549
        %v551 = vpop.f32.mrb[0].mxu0
        %552 = vmatprep.mubr.bf16.mxu0 0
        %553 = vmatmul.mubr.bf16.gmra.mrb[0].mxu0 %v433
        %v554 = vpop.f32.mrb[0].mxu0
        %v555 = vadd.f32 0.0, %v554
        %v556 = vpop.f32.mrb[0].mxu0
        %v557 = vpop.f32.mrb[0].mxu0
        %v558 = vadd.f32 0.0, %v557
        %v559 = vpop.f32.mrb[0].mxu0
        %560 = vmatprep.mubr.bf16.mxu0 0
        %561 = vmatmul.mubr.bf16.gmra.mrb[0].mxu0 %v434
        %v562 = vpop.f32.mrb[0].mxu0
        %v563 = vadd.f32 0.0, %v562
        %v564 = vpop.f32.mrb[0].mxu0
        %v565 = vpop.f32.mrb[0].mxu0
        %v566 = vadd.f32 0.0, %v565
        %v567 = vpop.f32.mrb[0].mxu0
        %568 = vmatprep.mubr.bf16.mxu0 0
        %569 = vmatmul.mubr.bf16.gmra.mrb[0].mxu0 %v435
        %v570 = vpop.f32.mrb[0].mxu0
        %v571 = vadd.f32 0.0, %v570
        %v572 = vpop.f32.mrb[0].mxu0
        %v573 = vpop.f32.mrb[0].mxu0
        %v574 = vadd.f32 0.0, %v573
        %v575 = vpop.f32.mrb[0].mxu0
        %576 = vmatprep.mubr.bf16.mxu0 0
        %577 = vmatmul.mubr.bf16.gmra.mrb[0].mxu0 %v436
        %v578 = vpop.f32.mrb[0].mxu0
        %v579 = vadd.f32 0.0, %v578
        %v580 = vpop.f32.mrb[0].mxu0
        %v581 = vpop.f32.mrb[0].mxu0
        %v582 = vadd.f32 0.0, %v581
        %v583 = vpop.f32.mrb[0].mxu0
        %584 = vmatprep.mubr.bf16.mxu0 0
        %585 = vmatmul.mubr.bf16.gmra.mrb[0].mxu0 %v437
        %v586 = vpop.f32.mrb[0].mxu0
        %v587 = vadd.f32 0.0, %v586
        %v588 = vpop.f32.mrb[0].mxu0
        %v589 = vpop.f32.mrb[0].mxu0
        %v590 = vadd.f32 0.0, %v589
        %v591 = vpop.f32.mrb[0].mxu0
        %592 = vmatprep.mubr.bf16.mxu0 0
        %593 = vmatmul.mubr.bf16.gmra.mrb[0].mxu0 %v438
        %v594 = vpop.f32.mrb[0].mxu0
        %v595 = vadd.f32 0.0, %v594
        %v596 = vpop.f32.mrb[0].mxu0
        %v597 = vpop.f32.mrb[0].mxu0
        %v598 = vadd.f32 0.0, %v597
        %v599 = vpop.f32.mrb[0].mxu0
        %600 = vmatprep.mubr.bf16.mxu0 0
        %601 = vmatmul.mubr.bf16.gmra.mrb[0].mxu0 %v439
        %v602 = vpop.f32.mrb[0].mxu0
        %v603 = vadd.f32 0.0, %v602
        %v604 = vpop.f32.mrb[0].mxu0
        %v605 = vpop.f32.mrb[0].mxu0
        %v606 = vadd.f32 0.0, %v605
        %v607 = vpop.f32.mrb[0].mxu0
        %608 = vmatprep.mubr.bf16.mxu0 0
        %609 = vmatmul.mubr.bf16.gmra.mrb[0].mxu0 %v440
        %v610 = vpop.f32.mrb[0].mxu0
        %v611 = vadd.f32 0.0, %v610
        %v612 = vpop.f32.mrb[0].mxu0
        %v613 = vpop.f32.mrb[0].mxu0
        %v614 = vadd.f32 0.0, %v613
        %v615 = vpop.f32.mrb[0].mxu0
        %616 = vmatprep.mubr.bf16.mxu0 0
        %617 = vmatmul.mubr.bf16.gmra.mrb[0].mxu0 %v441
        %v618 = vpop.f32.mrb[0].mxu0
        %v619 = vadd.f32 0.0, %v618
        %v620 = vpop.f32.mrb[0].mxu0
        %v621 = vpop.f32.mrb[0].mxu0
        %v622 = vadd.f32 0.0, %v621
        %v623 = vpop.f32.mrb[0].mxu0
        %624 = vmatprep.mubr.bf16.mxu0 0
        %625 = vmatmul.mubr.bf16.gmra.mrb[0].mxu0 %v442
        %v626 = vpop.f32.mrb[0].mxu0
        %v627 = vadd.f32 0.0, %v626
        %v628 = vpop.f32.mrb[0].mxu0
        %v629 = vpop.f32.mrb[0].mxu0
        %v630 = vadd.f32 0.0, %v629
        %v631 = vpop.f32.mrb[0].mxu0
        %632 = vmatprep.mubr.bf16.mxu0 0
        %633 = vmatmul.mubr.bf16.gmra.mrb[0].mxu0 %v443
        %v634 = vpop.f32.mrb[0].mxu0
        %v635 = vadd.f32 0.0, %v634
        %v636 = vpop.f32.mrb[0].mxu0
        %v637 = vpop.f32.mrb[0].mxu0
        %v638 = vadd.f32 0.0, %v637
        %v639 = vpop.f32.mrb[0].mxu0
        %640 = vmatprep.mubr.bf16.mxu0 0
        %641 = vmatmul.mubr.bf16.gmra.mrb[0].mxu0 %v444
        %v642 = vpop.f32.mrb[0].mxu0
        %v643 = vadd.f32 0.0, %v642
        %v644 = vpop.f32.mrb[0].mxu0
        %v645 = vpop.f32.mrb[0].mxu0
        %v646 = vadd.f32 0.0, %v645
        %v647 = vpop.f32.mrb[0].mxu0
        %648 = vmatprep.mubr.bf16.mxu0 0
        %649 = vmatmul.mubr.bf16.gmra.mrb[0].mxu0 %v445
        %v650 = vpop.f32.mrb[0].mxu0
        %v651 = vadd.f32 0.0, %v650
        %v652 = vpop.f32.mrb[0].mxu0
        %v653 = vpop.f32.mrb[0].mxu0
        %v654 = vadd.f32 0.0, %v653
        %v655 = vpop.f32.mrb[0].mxu0
        %656 = vmatprep.mubr.bf16.mxu0 0
        %657 = vmatmul.mubr.bf16.gmra.mrb[0].mxu0 %v446
        %v658 = vpop.f32.mrb[0].mxu0
        %v659 = vadd.f32 0.0, %v658
        %v660 = vpop.f32.mrb[0].mxu0
        %v661 = vpop.f32.mrb[0].mxu0
        %v662 = vadd.f32 0.0, %v661
        %v663 = vpop.f32.mrb[0].mxu0
        %664 = vmatprep.mubr.bf16.mxu0 0
        %665 = vmatmul.mubr.bf16.gmra.mrb[0].mxu0 %v447
        %v666 = vpop.f32.mrb[0].mxu0
        %v667 = vadd.f32 0.0, %v666
        %v668 = vpop.f32.mrb[0].mxu0
        %v669 = vpop.f32.mrb[0].mxu0
        %v670 = vadd.f32 0.0, %v669
        %v671 = vpop.f32.mrb[0].mxu0
        %672 = vdwg.mxu0
        %v673 = vadd.f32 %v288, %v547
        %v674 = vadd.f32 %v289, %v550
        %v675 = vadd.f32 %v290, %v555
        %v676 = vadd.f32 %v291, %v558
        %v677 = vadd.f32 %v292, %v563
        %v678 = vadd.f32 %v293, %v566
        %v679 = vadd.f32 %v294, %v571
        %v680 = vadd.f32 %v295, %v574
        %v681 = vadd.f32 %v296, %v579
        %v682 = vadd.f32 %v297, %v582
        %v683 = vadd.f32 %v298, %v587
        %v684 = vadd.f32 %v299, %v590
        %v685 = vadd.f32 %v300, %v595
        %v686 = vadd.f32 %v301, %v598
        %v687 = vadd.f32 %v302, %v603
        %v688 = vadd.f32 %v303, %v606
        %v689 = vadd.f32 %v304, %v611
        %v690 = vadd.f32 %v305, %v614
        %v691 = vadd.f32 %v306, %v619
        %v692 = vadd.f32 %v307, %v622
        %v693 = vadd.f32 %v308, %v627
        %v694 = vadd.f32 %v309, %v630
        %v695 = vadd.f32 %v310, %v635
        %v696 = vadd.f32 %v311, %v638
        %v697 = vadd.f32 %v312, %v643
        %v698 = vadd.f32 %v313, %v646
        %v699 = vadd.f32 %v314, %v651
        %v700 = vadd.f32 %v315, %v654
        %v701 = vadd.f32 %v316, %v659
        %v702 = vadd.f32 %v317, %v662
        %v703 = vadd.f32 %v318, %v667
        %v704 = vadd.f32 %v319, %v670
        %705 = vst [vmem:[#allocation2] sm:$0xff] %v673
        %706 = vst [vmem:[#allocation2 + $0x8] sm:$0xff] %v674
        %707 = vst [vmem:[#allocation2 + $0x10] sm:$0xff] %v675
        %708 = vst [vmem:[#allocation2 + $0x18] sm:$0xff] %v676
        %709 = vst [vmem:[#allocation2 + $0x20] sm:$0xff] %v677
        %710 = vst [vmem:[#allocation2 + $0x28] sm:$0xff] %v678
        %711 = vst [vmem:[#allocation2 + $0x30] sm:$0xff] %v679
        %712 = vst [vmem:[#allocation2 + $0x38] sm:$0xff] %v680
        %713 = vst [vmem:[#allocation2 + $0x40] sm:$0xff] %v681
        %714 = vst [vmem:[#allocation2 + $0x48] sm:$0xff] %v682
        %715 = vst [vmem:[#allocation2 + $0x50] sm:$0xff] %v683
        %716 = vst [vmem:[#allocation2 + $0x58] sm:$0xff] %v684
        %717 = vst [vmem:[#allocation2 + $0x60] sm:$0xff] %v685
        %718 = vst [vmem:[#allocation2 + $0x68] sm:$0xff] %v686
        %719 = vst [vmem:[#allocation2 + $0x70] sm:$0xff] %v687
        %720 = vst [vmem:[#allocation2 + $0x78] sm:$0xff] %v688
        %721 = vst [vmem:[#allocation2 + $0x80] sm:$0xff] %v689
        %722 = vst [vmem:[#allocation2 + $0x88] sm:$0xff] %v690
        %723 = vst [vmem:[#allocation2 + $0x90] sm:$0xff] %v691
        %724 = vst [vmem:[#allocation2 + $0x98] sm:$0xff] %v692
        %725 = vst [vmem:[#allocation2 + $0xa0] sm:$0xff] %v693
        %726 = vst [vmem:[#allocation2 + $0xa8] sm:$0xff] %v694
        %727 = vst [vmem:[#allocation2 + $0xb0] sm:$0xff] %v695
        %728 = vst [vmem:[#allocation2 + $0xb8] sm:$0xff] %v696
        %729 = vst [vmem:[#allocation2 + $0xc0] sm:$0xff] %v697
        %730 = vst [vmem:[#allocation2 + $0xc8] sm:$0xff] %v698
        %731 = vst [vmem:[#allocation2 + $0xd0] sm:$0xff] %v699
        %732 = vst [vmem:[#allocation2 + $0xd8] sm:$0xff] %v700
        %733 = vst [vmem:[#allocation2 + $0xe0] sm:$0xff] %v701
        %734 = vst [vmem:[#allocation2 + $0xe8] sm:$0xff] %v702
        %735 = vst [vmem:[#allocation2 + $0xf0] sm:$0xff] %v703
        %736 = vst [vmem:[#allocation2 + $0xf8] sm:$0xff] %v704
        // Predicated region
        $region37: #{matmul_bias_act.1} parent=31 // pred_check
          %p737 = pneg %p252
        $region38: #{matmul_bias_act.1} parent=31 // pred_check_branch
          %739 = sbr.rel (%p737) target = $region40
        $region39: #{matmul_bias_act.1} parent=31 // pred_region
          %v740 = vld [vmem:[#allocation2] sm:$0xff]
          %v741 = vld [vmem:[#allocation2 + $0x8] sm:$0xff]
          %v742 = vld [vmem:[#allocation2 + $0x10] sm:$0xff]
          %v743 = vld [vmem:[#allocation2 + $0x18] sm:$0xff]
          %v744 = vld [vmem:[#allocation2 + $0x20] sm:$0xff]
          %v745 = vld [vmem:[#allocation2 + $0x28] sm:$0xff]
          %v746 = vld [vmem:[#allocation2 + $0x30] sm:$0xff]
          %v747 = vld [vmem:[#allocation2 + $0x38] sm:$0xff]
          %v748 = vld [vmem:[#allocation2 + $0x40] sm:$0xff]
          %v749 = vld [vmem:[#allocation2 + $0x48] sm:$0xff]
          %v750 = vld [vmem:[#allocation2 + $0x50] sm:$0xff]
          %v751 = vld [vmem:[#allocation2 + $0x58] sm:$0xff]
          %v752 = vld [vmem:[#allocation2 + $0x60] sm:$0xff]
          %v753 = vld [vmem:[#allocation2 + $0x68] sm:$0xff]
          %v754 = vld [vmem:[#allocation2 + $0x70] sm:$0xff]
          %v755 = vld [vmem:[#allocation2 + $0x78] sm:$0xff]
          %v756 = vld [vmem:[#allocation2 + $0x80] sm:$0xff]
          %v757 = vld [vmem:[#allocation2 + $0x88] sm:$0xff]
          %v758 = vld [vmem:[#allocation2 + $0x90] sm:$0xff]
          %v759 = vld [vmem:[#allocation2 + $0x98] sm:$0xff]
          %v760 = vld [vmem:[#allocation2 + $0xa0] sm:$0xff]
          %v761 = vld [vmem:[#allocation2 + $0xa8] sm:$0xff]
          %v762 = vld [vmem:[#allocation2 + $0xb0] sm:$0xff]
          %v763 = vld [vmem:[#allocation2 + $0xb8] sm:$0xff]
          %v764 = vld [vmem:[#allocation2 + $0xc0] sm:$0xff]
          %v765 = vld [vmem:[#allocation2 + $0xc8] sm:$0xff]
          %v766 = vld [vmem:[#allocation2 + $0xd0] sm:$0xff]
          %v767 = vld [vmem:[#allocation2 + $0xd8] sm:$0xff]
          %v768 = vld [vmem:[#allocation2 + $0xe0] sm:$0xff]
          %v769 = vld [vmem:[#allocation2 + $0xe8] sm:$0xff]
          %v770 = vld [vmem:[#allocation2 + $0xf0] sm:$0xff]
          %v771 = vld [vmem:[#allocation2 + $0xf8] sm:$0xff]
          %v772 = vld [vmem:[%s249] sm:$0x1]
          %v774 = vlaneseq
          %v775 = vshrl.u32 %v774, 7
          %v776 = vsub.s32 0, %v775
          %v777 = vrot.slane %v772, %v776
          %v779 = vadd.f32 %v740, %v777
          %v780 = vadd.f32 %v741, %v777
          %v781 = vadd.f32 %v742, %v777
          %v782 = vadd.f32 %v743, %v777
          %v783 = vadd.f32 %v744, %v777
          %v784 = vadd.f32 %v745, %v777
          %v785 = vadd.f32 %v746, %v777
          %v786 = vadd.f32 %v747, %v777
          %v787 = vadd.f32 %v748, %v777
          %v788 = vadd.f32 %v749, %v777
          %v789 = vadd.f32 %v750, %v777
          %v790 = vadd.f32 %v751, %v777
          %v791 = vadd.f32 %v752, %v777
          %v792 = vadd.f32 %v753, %v777
          %v793 = vadd.f32 %v754, %v777
          %v794 = vadd.f32 %v755, %v777
          %v795 = vadd.f32 %v756, %v777
          %v796 = vadd.f32 %v757, %v777
          %v797 = vadd.f32 %v758, %v777
          %v798 = vadd.f32 %v759, %v777
          %v799 = vadd.f32 %v760, %v777
          %v800 = vadd.f32 %v761, %v777
          %v801 = vadd.f32 %v762, %v777
          %v802 = vadd.f32 %v763, %v777
          %v803 = vadd.f32 %v764, %v777
          %v804 = vadd.f32 %v765, %v777
          %v805 = vadd.f32 %v766, %v777
          %v806 = vadd.f32 %v767, %v777
          %v807 = vadd.f32 %v768, %v777
          %v808 = vadd.f32 %v769, %v777
          %v809 = vadd.f32 %v770, %v777
          %v810 = vadd.f32 %v771, %v777
          %v811 = vmax.f32 %v779, 0.0
          %v812 = vmax.f32 %v780, 0.0
          %v813 = vmax.f32 %v781, 0.0
          %v814 = vmax.f32 %v782, 0.0
          %v815 = vmax.f32 %v783, 0.0
          %v816 = vmax.f32 %v784, 0.0
          %v817 = vmax.f32 %v785, 0.0
          %v818 = vmax.f32 %v786, 0.0
          %v819 = vmax.f32 %v787, 0.0
          %v820 = vmax.f32 %v788, 0.0
          %v821 = vmax.f32 %v789, 0.0
          %v822 = vmax.f32 %v790, 0.0
          %v823 = vmax.f32 %v791, 0.0
          %v824 = vmax.f32 %v792, 0.0
          %v825 = vmax.f32 %v793, 0.0
          %v826 = vmax.f32 %v794, 0.0
          %v827 = vmax.f32 %v795, 0.0
          %v828 = vmax.f32 %v796, 0.0
          %v829 = vmax.f32 %v797, 0.0
          %v830 = vmax.f32 %v798, 0.0
          %v831 = vmax.f32 %v799, 0.0
          %v832 = vmax.f32 %v800, 0.0
          %v833 = vmax.f32 %v801, 0.0
          %v834 = vmax.f32 %v802, 0.0
          %v835 = vmax.f32 %v803, 0.0
          %v836 = vmax.f32 %v804, 0.0
          %v837 = vmax.f32 %v805, 0.0
          %v838 = vmax.f32 %v806, 0.0
          %v839 = vmax.f32 %v807, 0.0
          %v840 = vmax.f32 %v808, 0.0
          %v841 = vmax.f32 %v809, 0.0
          %v842 = vmax.f32 %v810, 0.0
          %v843 = vpack.c.bf16 %v812, %v811
          %v844 = vpack.c.bf16 %v814, %v813
          %v845 = vpack.c.bf16 %v816, %v815
          %v846 = vpack.c.bf16 %v818, %v817
          %v847 = vpack.c.bf16 %v820, %v819
          %v848 = vpack.c.bf16 %v822, %v821
          %v849 = vpack.c.bf16 %v824, %v823
          %v850 = vpack.c.bf16 %v826, %v825
          %v851 = vpack.c.bf16 %v828, %v827
          %v852 = vpack.c.bf16 %v830, %v829
          %v853 = vpack.c.bf16 %v832, %v831
          %v854 = vpack.c.bf16 %v834, %v833
          %v855 = vpack.c.bf16 %v836, %v835
          %v856 = vpack.c.bf16 %v838, %v837
          %v857 = vpack.c.bf16 %v840, %v839
          %v858 = vpack.c.bf16 %v842, %v841
          %v875 = vunpack.c.l.b16 %v843
          %v876 = vunpack.c.h.b16 %v843
          %v877 = vunpack.c.l.b16 %v844
          %v878 = vunpack.c.h.b16 %v844
          %v879 = vunpack.c.l.b16 %v845
          %v880 = vunpack.c.h.b16 %v845
          %v881 = vunpack.c.l.b16 %v846
          %v882 = vunpack.c.h.b16 %v846
          %v883 = vunpack.c.l.b16 %v847
          %v884 = vunpack.c.h.b16 %v847
          %v885 = vunpack.c.l.b16 %v848
          %v886 = vunpack.c.h.b16 %v848
          %v887 = vunpack.c.l.b16 %v849
          %v888 = vunpack.c.h.b16 %v849
          %v889 = vunpack.c.l.b16 %v850
          %v890 = vunpack.c.h.b16 %v850
          %v891 = vunpack.c.l.b16 %v851
          %v892 = vunpack.c.h.b16 %v851
          %v893 = vunpack.c.l.b16 %v852
          %v894 = vunpack.c.h.b16 %v852
          %v895 = vunpack.c.l.b16 %v853
          %v896 = vunpack.c.h.b16 %v853
          %v897 = vunpack.c.l.b16 %v854
          %v898 = vunpack.c.h.b16 %v854
          %v899 = vunpack.c.l.b16 %v855
          %v900 = vunpack.c.h.b16 %v855
          %v901 = vunpack.c.l.b16 %v856
          %v902 = vunpack.c.h.b16 %v856
          %v903 = vunpack.c.l.b16 %v857
          %v904 = vunpack.c.h.b16 %v857
          %v905 = vunpack.c.l.b16 %v858
          %v906 = vunpack.c.h.b16 %v858
          %v907 = vpack.c.b16 %v875, %v875
          %v908 = vpack.c.b16 %v876, %v876
          %v909 = vpack.c.b16 %v877, %v877
          %v910 = vpack.c.b16 %v878, %v878
          %v911 = vpack.c.b16 %v879, %v879
          %v912 = vpack.c.b16 %v880, %v880
          %v913 = vpack.c.b16 %v881, %v881
          %v914 = vpack.c.b16 %v882, %v882
          %v915 = vpack.c.b16 %v883, %v883
          %v916 = vpack.c.b16 %v884, %v884
          %v917 = vpack.c.b16 %v885, %v885
          %v918 = vpack.c.b16 %v886, %v886
          %v919 = vpack.c.b16 %v887, %v887
          %v920 = vpack.c.b16 %v888, %v888
          %v921 = vpack.c.b16 %v889, %v889
          %v922 = vpack.c.b16 %v890, %v890
          %v923 = vpack.c.b16 %v891, %v891
          %v924 = vpack.c.b16 %v892, %v892
          %v925 = vpack.c.b16 %v893, %v893
          %v926 = vpack.c.b16 %v894, %v894
          %v927 = vpack.c.b16 %v895, %v895
          %v928 = vpack.c.b16 %v896, %v896
          %v929 = vpack.c.b16 %v897, %v897
          %v930 = vpack.c.b16 %v898, %v898
          %v931 = vpack.c.b16 %v899, %v899
          %v932 = vpack.c.b16 %v900, %v900
          %v933 = vpack.c.b16 %v901, %v901
          %v934 = vpack.c.b16 %v902, %v902
          %v935 = vpack.c.b16 %v903, %v903
          %v936 = vpack.c.b16 %v904, %v904
          %v937 = vpack.c.b16 %v905, %v905
          %v938 = vpack.c.b16 %v906, %v906
          %971 = vst [vmem:[%s228] sm:$0xf] %v907
          %972 = vst [vmem:[%s228 + $0x4] sm:$0xf] %v908
          %973 = vst [vmem:[%s228 + $0x8] sm:$0xf] %v909
          %974 = vst [vmem:[%s228 + $0xc] sm:$0xf] %v910
          %975 = vst [vmem:[%s228 + $0x10] sm:$0xf] %v911
          %976 = vst [vmem:[%s228 + $0x14] sm:$0xf] %v912
          %977 = vst [vmem:[%s228 + $0x18] sm:$0xf] %v913
          %978 = vst [vmem:[%s228 + $0x1c] sm:$0xf] %v914
          %979 = vst [vmem:[%s228 + $0x20] sm:$0xf] %v915
          %980 = vst [vmem:[%s228 + $0x24] sm:$0xf] %v916
          %981 = vst [vmem:[%s228 + $0x28] sm:$0xf] %v917
          %982 = vst [vmem:[%s228 + $0x2c] sm:$0xf] %v918
          %983 = vst [vmem:[%s228 + $0x30] sm:$0xf] %v919
          %984 = vst [vmem:[%s228 + $0x34] sm:$0xf] %v920
          %985 = vst [vmem:[%s228 + $0x38] sm:$0xf] %v921
          %986 = vst [vmem:[%s228 + $0x3c] sm:$0xf] %v922
          %987 = vst [vmem:[%s228 + $0x40] sm:$0xf] %v923
          %988 = vst [vmem:[%s228 + $0x44] sm:$0xf] %v924
          %989 = vst [vmem:[%s228 + $0x48] sm:$0xf] %v925
          %990 = vst [vmem:[%s228 + $0x4c] sm:$0xf] %v926
          %991 = vst [vmem:[%s228 + $0x50] sm:$0xf] %v927
          %992 = vst [vmem:[%s228 + $0x54] sm:$0xf] %v928
          %993 = vst [vmem:[%s228 + $0x58] sm:$0xf] %v929
          %994 = vst [vmem:[%s228 + $0x5c] sm:$0xf] %v930
          %995 = vst [vmem:[%s228 + $0x60] sm:$0xf] %v931
          %996 = vst [vmem:[%s228 + $0x64] sm:$0xf] %v932
          %997 = vst [vmem:[%s228 + $0x68] sm:$0xf] %v933
          %998 = vst [vmem:[%s228 + $0x6c] sm:$0xf] %v934
          %999 = vst [vmem:[%s228 + $0x70] sm:$0xf] %v935
          %1000 = vst [vmem:[%s228 + $0x74] sm:$0xf] %v936
          %1001 = vst [vmem:[%s228 + $0x78] sm:$0xf] %v937
          %1002 = vst [vmem:[%s228 + $0x7c] sm:$0xf] %v938
        $region40: #{matmul_bias_act.1} parent=31 // pred_fallthru
          _
        %s1003 = sand.u32 %s128, 1
        %s1004 = scalar_lea.sflag [#allocation4], %s1003
        %s1005 = sand.u32 %s128, 1
        %s1006 = smul.addr %s1005, 128
        %s1007 = scalar_lea.vmem [#allocation3], %s1006
        // Predicated region
        $region41: #{matmul_bias_act.1} parent=31 // pred_check
          %p1008 = pneg %p138
        $region42: #{matmul_bias_act.1} parent=31 // pred_check_branch
          %1010 = sbr.rel (%p1008) target = $region44
        $region43: #{matmul_bias_act.1} parent=31 // pred_region
          %s1011 = smul.u32 32, %s22
          %s1013 = ssub.s32 2048, 2048
          %1014 = vsyncadd %s1004, %s1013
          %s1015 = sadd.s32 %s23, %s1011
          %s1016 = smul.addr %s1015, 64
          %s1017 = scalar_lea.hbm %s3, %s1016
          %s1018 = sshll.u32 %s1007, 4
          %s1019 = int_to_ptr.vmem [resolvable:$true] %s1018
          %1024 = dma.vmem_to_hbm [thread:$0]  %s1019, 2048, %s1017, %s1004, 64, 64, 4
        $region44: #{matmul_bias_act.1} parent=31 // pred_fallthru
          _
      $region32: #{matmul_bias_act.1} parent=5 // pred_fallthru
        _
      %p1025 = scmp.le.s32.totalorder 2, %s12
      // Predicated region
      $region45: #{matmul_bias_act.1} parent=5 // pred_check
        %p1026 = pneg %p1025
      $region46: #{matmul_bias_act.1} parent=5 // pred_check_branch
        %1028 = sbr.rel (%p1026) target = $region48
      $region47: #{matmul_bias_act.1} parent=5 // pred_region
        %s1029 = ssub.s32 %s12, 2
        // Predicated region
        $region49: #{matmul_bias_act.1} parent=47 // pred_check
          %p1030 = pneg %p144
        $region50: #{matmul_bias_act.1} parent=47 // pred_check_branch
          %1032 = sbr.rel (%p1030) target = $region52
        $region51: #{matmul_bias_act.1} parent=47 // pred_region
          %s1033 = sand.u32 %s129, 1
          %s1034 = scalar_lea.sflag [#allocation4], %s1033
          %s1035 = sand.u32 %s129, 1
          %s1036 = smul.addr %s1035, 128
          %s1037 = scalar_lea.vmem [#allocation3], %s1036
          %1038 = dma.done %s1034, 2048
        $region52: #{matmul_bias_act.1} parent=47 // pred_fallthru
          _
      $region48: #{matmul_bias_act.1} parent=5 // pred_fallthru
        _
    $region6: #{matmul_bias_act.1} parent=1 // loop_footer
      %s16 = sadd.s32 1, %s12
    $region7: #{matmul_bias_act.1} parent=1 // loop_footer_branch
      %11 = sbr.rel target = $region3
    $region8: #{matmul_bias_act.1} parent=1 // loop_exit
      _
    %1039 = vsyncpa [#allocation4], 1
    %s1040 = scalar_lea.sflag [#allocation4], 1
    %1041 = vsyncpa %s1040, 1

</llo_original>
